<compile_context>
chip_gen: v5e
topology: v5e:2x2
jax: 0.10.0
libtpu: 0.0.40
codegen_flags: <defaults>
</compile_context>

<pallas_src>
import math

import numpy as np
import jax
import jax.numpy as jnp
from jax.experimental import pallas as pl
from jax.experimental.pallas import tpu as pltpu

# ----------------------------- config ---------------------------------------
LATENT = 32                      # encoder latent_size
HIDDEN = 64                      # per-MLP hidden width (fused -> 128)
NUM_FREQS = 6
FREQ_FACTOR = math.pi
D_PE = 3 * 2 * NUM_FREQS         # 36 positional-encoding channels
D_IN = 3 + D_PE                  # 39
D_LATENT = LATENT
D_FEAT = D_LATENT + 3            # 35 streamed rows per point (latent + xyz)
D_OUT = 4
FUSED_H = 2 * HIDDEN             # 128
FUSED_O = 2 * D_OUT              # 8


def _round_up(n, m):
    return ((n + m - 1) // m) * m


def _pick_tile(n, max_tile):
    """Lane tile: multiple of 128, large, and >=2 grid steps when possible."""
    t = min(max_tile, _round_up(n, 128))
    if n > 128 and _round_up(n, t) // t < 2:
        t = max(128, _round_up((n + 1) // 2, 128))
    return t


# ----------------------- Pallas kernel: encoder ------------------------------
def _enc_kernel(xT_ref, w_ref, b_ref, o_ref):
    # latentT = relu(W (32,3) @ xT (3, T) + b)   -- lane-dense in/out
    o_ref[...] = jnp.maximum(
        jnp.dot(w_ref[...], xT_ref[...], preferred_element_type=jnp.float32)
        + b_ref[...],
        0.0,
    )


def encoder_conv1x1(images_nchw, wT, bT, *, max_tile=2048):
    """images (NS, 3, H, W) NCHW -> latent (NS, L, H, W) via Pallas matmul."""
    NS, C, H, W = images_nchw.shape
    L = wT.shape[0]
    xT = jnp.transpose(images_nchw, (1, 0, 2, 3)).reshape(C, -1)  # (3, NS*H*W)
    N = xT.shape[1]
    tile = _pick_tile(N, max_tile)
    Np = _round_up(N, tile)
    if Np != N:
        xT = jnp.pad(xT, ((0, 0), (0, Np - N)))

    out = pl.pallas_call(
        _enc_kernel,
        out_shape=jax.ShapeDtypeStruct((L, Np), jnp.float32),
        grid=(Np // tile,),
        in_specs=[
            pl.BlockSpec((C, tile), lambda i: (0, i)),
            pl.BlockSpec((L, C), lambda i: (0, 0)),
            pl.BlockSpec((L, 1), lambda i: (0, 0)),
        ],
        out_specs=pl.BlockSpec((L, tile), lambda i: (0, i)),
        compiler_params=pltpu.CompilerParams(
            dimension_semantics=("parallel",)),
    )(xT, wT, bT)

    out = out[:, :N].reshape(L, NS, H, W)
    return jnp.transpose(out, (1, 0, 2, 3))                       # (NS, L, H, W)


# ------------------- Pallas kernel: fused NeRF head (hot path) ---------------
def _nerf_head_kernel(featT_ref, pe_a_ref, pe_ph_ref,
                      w1f_ref, w1p_ref, b1_ref,
                      w2_ref, b2_ref, w3_ref, b3_ref,
                      o_ref):
    featT = featT_ref[...]                      # (35, T): 0..31 latent, 32..34 xyz
    xyzT = featT[D_LATENT:, :]                  # (3, T)

    # Positional encoding fused in-kernel (sin -> EUP slot): (36, T)
    peT = jnp.sin(
        jnp.dot(pe_a_ref[...], xyzT, preferred_element_type=jnp.float32)
        + pe_ph_ref[...])

    # Fused obj|bg layer 1  (128, T)
    h1 = (jnp.dot(w1f_ref[...], featT, preferred_element_type=jnp.float32)
          + jnp.dot(w1p_ref[...], peT, preferred_element_type=jnp.float32)
          + b1_ref[...])
    h1 = jnp.maximum(h1, 0.0)

    # Block-diagonal layer 2  (128, T)
    h2 = jnp.maximum(
        jnp.dot(w2_ref[...], h1, preferred_element_type=jnp.float32)
        + b2_ref[...],
        0.0)

    # Block-diagonal layer 3  (8, T): rows 0..3 obj, 4..7 bg
    raw = jnp.dot(w3_ref[...], h2, preferred_element_type=jnp.float32) + b3_ref[...]

    obj_rgb, obj_sigma = raw[0:3, :], raw[3:4, :]
    bg_rgb, bg_sigma = raw[4:7, :], raw[7:8, :]

    sigma = obj_sigma + bg_sigma
    denom = jnp.where(sigma == 0.0, jnp.float32(1e-4), sigma)
    inv = pl.reciprocal(denom, approx=True)          # EUP, not VALU divide
    rgb = (obj_rgb * obj_sigma + bg_rgb * bg_sigma) * inv

    o_ref[...] = jnp.concatenate(
        [jax.nn.sigmoid(rgb), jnp.maximum(sigma, 0.0)], axis=0)   # (4, T)


def nerf_head(featT, pe_a, pe_ph, fused_params, *, max_tile=1024):
    """featT (35, N) -> blended (4, N) output; all compute in one Pallas kernel."""
    Dfeat, N = featT.shape
    w1f, w1p, b1, w2, b2, w3, b3 = fused_params

    tile = _pick_tile(N, max_tile)
    Np = _round_up(N, tile)
    if Np != N:
        featT = jnp.pad(featT, ((0, 0), (0, Np - N)))

    def const(shape):
        return pl.BlockSpec(shape, lambda i: (0, 0))

    out = pl.pallas_call(
        _nerf_head_kernel,
        out_shape=jax.ShapeDtypeStruct((D_OUT, Np), jnp.float32),
        grid=(Np // tile,),
        in_specs=[
            pl.BlockSpec((Dfeat, tile), lambda i: (0, i)),
            const(pe_a.shape), const(pe_ph.shape),
            const(w1f.shape), const(w1p.shape), const(b1.shape),
            const(w2.shape), const(b2.shape),
            const(w3.shape), const(b3.shape),
        ],
        out_specs=pl.BlockSpec((D_OUT, tile), lambda i: (0, i)),
        compiler_params=pltpu.CompilerParams(
            dimension_semantics=("parallel",)),
    )(featT, pe_a, pe_ph, w1f, w1p, b1, w2, b2, w3, b3)

    return out[:, :N]                                             # (4, N)


# ------------------------------ JAX glue -------------------------------------
def _pe_constants():
    """Constants so that peT = sin(A @ xyzT + phase); PyTorch ordering:
    [sin(f0 x), sin(f0 y), sin(f0 z), cos(f0 x), ..., cos(f5 z)]."""
    a = np.zeros((D_PE, 3), np.float32)
    ph = np.zeros((D_PE, 1), np.float32)
    for j in range(D_PE):
        g = j // 3
        a[j, j % 3] = FREQ_FACTOR * (2.0 ** (g // 2))
        ph[j, 0] = 0.0 if g % 2 == 0 else 0.5 * math.pi
    return jnp.asarray(a), jnp.asarray(ph)


def index_bilinear(latent, uv, image_shape, latent_scaling):
    """Equivalent of SpatialEncoder.index: grid_sample(bilinear, border,
    align_corners=True) of latent (NV, L, Hl, Wl) at pixel coords uv (NV, B, 2).
    Returns (NV, L, B)."""
    # TODO(synk): data-dependent 4-tap gather kept in JAX glue rather than an
    # in-kernel VMEM gather (latent is small; could be fused into nerf_head).
    NV, L, Hl, Wl = latent.shape
    scale = latent_scaling / image_shape                           # (2,)
    g = uv * scale - 1.0                                           # in [-1, 1]
    gx = (g[..., 0] + 1.0) * 0.5 * (Wl - 1)
    gy = (g[..., 1] + 1.0) * 0.5 * (Hl - 1)
    gx = jnp.clip(gx, 0.0, Wl - 1)                                 # border pad
    gy = jnp.clip(gy, 0.0, Hl - 1)
    x0 = jnp.floor(gx)
    y0 = jnp.floor(gy)
    wx = gx - x0
    wy = gy - y0
    x0i = jnp.clip(x0, 0, Wl - 1).astype(jnp.int32)
    y0i = jnp.clip(y0, 0, Hl - 1).astype(jnp.int32)
    x1i = jnp.clip(x0 + 1, 0, Wl - 1).astype(jnp.int32)
    y1i = jnp.clip(y0 + 1, 0, Hl - 1).astype(jnp.int32)

    def per_view(lat, x0i, x1i, y0i, y1i, wx, wy):
        v00 = lat[:, y0i, x0i]   # (L, B)
        v01 = lat[:, y0i, x1i]
        v10 = lat[:, y1i, x0i]
        v11 = lat[:, y1i, x1i]
        top = v00 * (1.0 - wx) + v01 * wx
        bot = v10 * (1.0 - wx) + v11 * wx
        return top * (1.0 - wy) + bot * wy

    return jax.vmap(per_view)(latent, x0i, x1i, y0i, y1i, wx, wy)


class PixelNeRFNetPallas:
    """Mirror of PixelNeRFNet.encode / .forward with Pallas compute kernels."""

    def __init__(self, key):
        ks = jax.random.split(key, 8)

        def lin_t(k, din, dout):
            # transposed (dout, din) weight, PyTorch-style uniform init, zero bias
            bound = 1.0 / math.sqrt(din)
            w = jax.random.uniform(k, (dout, din), jnp.float32, -bound, bound)
            b = jnp.zeros((dout,), jnp.float32)
            return w, b

        # encoder (1x1 conv, transposed weight (L, 3))
        self.enc_w, eb = lin_t(ks[0], 3, LATENT)
        self.enc_b = eb[:, None]                                   # (L, 1)

        def mlp_params(k):
            k1, k2, k3 = jax.random.split(k, 3)
            return (lin_t(k1, D_LATENT + D_IN, HIDDEN),
                    lin_t(k2, HIDDEN, HIDDEN),
                    lin_t(k3, HIDDEN, D_OUT))

        (ow1, ob1), (ow2, ob2), (ow3, ob3) = mlp_params(ks[1])
        (bw1, bb1), (bw2, bb2), (bw3, bb3) = mlp_params(ks[2])
        # TODO(synk): mlp_fine is allow_empty=True in the config; coarse only here.

        # ---- fuse obj|bg into concatenated / block-diagonal weights ----------
        w1 = jnp.concatenate([ow1, bw1], axis=0)                   # (128, 71)
        w1f = w1[:, :D_FEAT]                                       # (128, 35) latent+xyz
        w1p = w1[:, D_FEAT:]                                       # (128, 36) PE
        b1 = jnp.concatenate([ob1, bb1])[:, None]                  # (128, 1)
        w2 = jnp.zeros((FUSED_H, FUSED_H), jnp.float32)
        w2 = w2.at[:HIDDEN, :HIDDEN].set(ow2).at[HIDDEN:, HIDDEN:].set(bw2)
        b2 = jnp.concatenate([ob2, bb2])[:, None]                  # (128, 1)
        w3 = jnp.zeros((FUSED_O, FUSED_H), jnp.float32)
        w3 = w3.at[:D_OUT, :HIDDEN].set(ow3).at[D_OUT:, HIDDEN:].set(bw3)
        b3 = jnp.concatenate([ob3, bb3])[:, None]                  # (8, 1)
        self.fused_mlp_coarse = (w1f, w1p, b1, w2, b2, w3, b3)

        self.pe_a, self.pe_ph = _pe_constants()

        self.num_objs = 0
        self.num_views_per_obj = 1

    # ------------------------------ encode -----------------------------------
    def encode(self, images, poses, focal, z_bounds=None, c=None):
        """images (NS, 3, H, W) NCHW, poses (NS, 4, 4), focal scalar/(2,)/(NS,2)."""
        self.num_objs = images.shape[0]
        self.num_views_per_obj = 1  # 4-D images path

        # spatial encoder (Pallas lane-dense matmul kernel)
        self.latent = encoder_conv1x1(images, self.enc_w, self.enc_b)

        rot = jnp.transpose(poses[:, :3, :3], (0, 2, 1))
        trans = -jnp.einsum('nij,njk->nik', rot, poses[:, :3, 3:])
        self.poses = jnp.concatenate([rot, trans], axis=-1)        # (NS, 3, 4)

        self.image_shape = jnp.array(
            [images.shape[-1], images.shape[-2]], jnp.float32)     # (W, H)

        focal = jnp.asarray(focal, jnp.float32)
        if focal.ndim == 0:
            focal = jnp.broadcast_to(focal[None, None], (1, 2))
        elif focal.ndim == 1:
            focal = jnp.repeat(focal[:, None], 2, axis=1)
        self.focal = focal * jnp.array([1.0, -1.0], jnp.float32)

        if c is None:
            c = (self.image_shape * 0.5)[None]
        self.c = jnp.asarray(c, jnp.float32)

        Hl, Wl = self.latent.shape[-2], self.latent.shape[-1]
        ls = jnp.array([Wl, Hl], jnp.float32)
        self.latent_scaling = ls / (ls - 1.0) * 2.0

    # ------------------------------ forward ----------------------------------
    def forward(self, xyz, coarse=True, viewdirs=None, far=False):
        SB, B, _ = xyz.shape
        NS = self.num_views_per_obj                                # == 1

        # repeat_interleave(xyz, NS) is identity for NS == 1
        xyz_rot = jnp.einsum('nij,nbj->nbi', self.poses[:, :3, :3], xyz)
        xyz_w = xyz_rot + self.poses[:, None, :3, 3]

        # project to image plane, sample encoder latent (JAX glue gather)
        uv = -xyz_w[:, :, :2] / xyz_w[:, :, 2:]
        uv = uv * self.focal[:, None, :]
        uv = uv + self.c[:, None, :]
        latent = index_bilinear(
            self.latent, uv, self.image_shape, self.latent_scaling)  # (SB, L, B)

        # channels-on-sublanes / points-on-lanes streaming input (35, N)
        latT = jnp.transpose(latent, (1, 0, 2)).reshape(D_LATENT, -1)
        xyzT = jnp.transpose(xyz_rot, (2, 0, 1)).reshape(3, -1)    # use_xyz+normalize_z
        featT = jnp.concatenate([latT, xyzT], axis=0)              # (35, SB*B)

        # fused obj+bg MLPs, in-kernel positional encoding, sigma blend.
        # combine_inner_dims=(NS=1, B) -> mean over 1 view == identity.
        out = nerf_head(featT, self.pe_a, self.pe_ph, self.fused_mlp_coarse)
        return jnp.transpose(out.reshape(D_OUT, SB, B), (1, 2, 0))  # (SB, B, 4)


# ------------------------------- driver --------------------------------------
if __name__ == "__main__":
    key = jax.random.PRNGKey(0)
    k_img, k_xyz, k_par = jax.random.split(key, 3)

    SB, B, H, W = 2, 64, 16, 16
    images = jax.random.normal(k_img, (SB, 3, H, W), jnp.float32)

    # camera-to-world poses: identity rotation, translation along +z
    poses = jnp.tile(jnp.eye(4, dtype=jnp.float32)[None], (SB, 1, 1))
    poses = poses.at[:, 2, 3].set(jnp.array([2.5, 3.0], jnp.float32))
    focal = jnp.float32(20.0)

    xyz = 0.3 * jax.random.normal(k_xyz, (SB, B, 3), jnp.float32)

    model = PixelNeRFNetPallas(k_par)
    model.encode(images, poses, focal)
    out = model.forward(xyz, coarse=True)
    out = jax.block_until_ready(out)

    assert out.shape == (SB, B, 4), out.shape
    assert bool(jnp.all(jnp.isfinite(out)))
    print("KERNEL_OK")
</pallas_src>

<mosaic_0001>
module attributes {stable_mosaic.version = 11 : i64} {
  func.func @_enc_kernel(%arg0: i32, %arg1: memref<3x256xf32, #tpu.memory_space<vmem>>, %arg2: memref<32x3xf32, #tpu.memory_space<vmem>>, %arg3: memref<32x1xf32, #tpu.memory_space<vmem>>, %arg4: memref<32x256xf32, #tpu.memory_space<vmem>>) attributes {dimension_semantics = [#tpu.dimension_semantics<parallel>], iteration_bounds = array<i64: 2>, scalar_prefetch = 0 : i64, scratch_operands = 0 : i64, tpu.core_type = #tpu.core_type<tc>, window_params = [{transform_indices = @transform_0, window_bounds = array<i64: 3, 256>}, {pipeline_mode = #tpu.pipeline_mode<synchronous>, transform_indices = @transform_1, window_bounds = array<i64: 32, 3>}, {pipeline_mode = #tpu.pipeline_mode<synchronous>, transform_indices = @transform_2, window_bounds = array<i64: 32, 1>}, {transform_indices = @transform_3, window_bounds = array<i64: 32, 256>}]} {
    %c0 = arith.constant 0 : index
    %c0_0 = arith.constant 0 : index
    %0 = vector.load %arg2[%c0, %c0_0] : memref<32x3xf32, #tpu.memory_space<vmem>>, vector<32x3xf32>
    %c0_1 = arith.constant 0 : index
    %c0_2 = arith.constant 0 : index
    %1 = vector.load %arg1[%c0_1, %c0_2] : memref<3x256xf32, #tpu.memory_space<vmem>>, vector<3x256xf32>
    %cst = arith.constant dense<0.000000e+00> : vector<32x256xf32>
    %2 = tpu.matmul %0, %1, %cst {dimension_numbers = #tpu.dot_dimension_numbers<[1], [0], [0], [1], [0, 0, 1, 1], [], []>} : vector<32x3xf32>, vector<3x256xf32>, vector<32x256xf32> -> vector<32x256xf32>
    %c0_3 = arith.constant 0 : index
    %c0_4 = arith.constant 0 : index
    %3 = vector.load %arg3[%c0_3, %c0_4] : memref<32x1xf32, #tpu.memory_space<vmem>>, vector<32x1xf32>
    %4 = vector.broadcast %3 : vector<32x1xf32> to vector<32x256xf32>
    %5 = arith.addf %2, %4 : vector<32x256xf32>
    %cst_5 = arith.constant 0.000000e+00 : f32
    %6 = vector.broadcast %cst_5 : f32 to vector<32x256xf32>
    %7 = arith.maximumf %5, %6 : vector<32x256xf32>
    %c0_6 = arith.constant 0 : index
    %c0_7 = arith.constant 0 : index
    %8 = vector.load %arg4[%c0_6, %c0_7] : memref<32x256xf32, #tpu.memory_space<vmem>>, vector<32x256xf32>
    tpu.vector_store %arg4[%c0_6, %c0_7], %7 {strides = array<i32>} : memref<32x256xf32, #tpu.memory_space<vmem>>, vector<32x256xf32>,
    return
  }
  func.func @transform_0(%arg0: i32) -> (i32, i32) {
    %c0_i32 = arith.constant 0 : i32
    %c0_i32_0 = arith.constant 0 : i32
    return %c0_i32, %arg0 : i32, i32
  }
  func.func @transform_1(%arg0: i32) -> (i32, i32) {
    %c0_i32 = arith.constant 0 : i32
    %c0_i32_0 = arith.constant 0 : i32
    %c0_i32_1 = arith.constant 0 : i32
    return %c0_i32, %c0_i32_0 : i32, i32
  }
  func.func @transform_2(%arg0: i32) -> (i32, i32) {
    %c0_i32 = arith.constant 0 : i32
    %c0_i32_0 = arith.constant 0 : i32
    %c0_i32_1 = arith.constant 0 : i32
    return %c0_i32, %c0_i32_0 : i32, i32
  }
  func.func @transform_3(%arg0: i32) -> (i32, i32) {
    %c0_i32 = arith.constant 0 : i32
    %c0_i32_0 = arith.constant 0 : i32
    return %c0_i32, %arg0 : i32, i32
  }
}

</mosaic_0001>

<llo_original>
// kernel: tpu_custom_call.1
$region0: #{tpu_custom_call.1}
  #allocation0 [shape = 'u32[]', space=smem, size = 0x4, offset = 0x4, fixed_abs, tag = 'smem constant byte address 0x4 - core index']
  #allocation1 [shape = 'u32[72,128]{1,0:T(1,128)}', space=vmem, size = 0x9000, scoped, tag = 'internal scratch']
  %s0 = inlined_call_operand.vmem [shape: f32[3,512], index: 0, kind: input, shape index: {}]
  %s1 = inlined_call_operand.vmem [shape: f32[32,3], index: 1, kind: input, shape index: {}]
  %s2 = inlined_call_operand.vmem [shape: f32[32,1], index: 2, kind: input, shape index: {}]
  %s3 = inlined_call_operand.hbm [shape: f32[32,512], index: 3, kind: output, shape index: {}]
  %s4 = sld [smem:[#allocation0]]
  $region45: #{tpu_custom_call.1} parent=0
    _
  %s6 = ssub.s32 1, %s4
  %s7 = scalar_select 0, %s6, %s4
  $region1: #{tpu_custom_call.1} parent=0
    #allocation2 [shape = 'u8[65536]{0}', space=vmem, size = 0x10000, scoped, tag = 'output window, operand 0']
    #allocation3 [shape = 's32[2]{0}', space=sflag, size = 0x8, scoped, tag = 'scoped memory for tpu_custom_call.1']
    %8 = vsyncpa [#allocation3], 0
    %s9 = scalar_lea.sflag [#allocation3], 1
    %10 = vsyncpa %s9, 0
    loop: start=0, step=1, limit=4
    $region2: #{tpu_custom_call.1} parent=1 // loop_pre_header
      _
    $region3: #{tpu_custom_call.1} parent=1 // loop_header
      %s12 = sphi 0, %s16
      %p13 = scmp.ge.s32.totalorder %s12, 4
      %s22 = sphi 0, %s24
      %s25 = sphi 0, %s22
      %s26 = sphi 0, %s25
      %s42 = sphi 0, %s26
      %s46 = sphi 0, %s46
      %s48 = sphi 0, %s46
      %s49 = sphi 0, %s48
      %s63 = sphi 0, %s49
      %s67 = sphi 0, %s67
      %s69 = sphi 0, %s67
      %s70 = sphi 0, %s69
      %s84 = sphi 0, %s70
      %s90 = sphi 0, %s92
      %s93 = sphi 0, %s90
      %s94 = sphi 0, %s93
      %s110 = sphi 0, %s94
    $region4: #{tpu_custom_call.1} parent=1 // loop_header_branch
      %15 = sbr.rel (%p13) target = $region8
    $region5: #{tpu_custom_call.1} parent=1 // loop_body
      %s17 = ssub.s32 %s12, 1
      %s18 = ssub.s32 %s12, 2
      %s19 = sadd.s32 %s12, 1
      %s20 = ssub.s32 %s12, %s19
      %p21 = scmp.eq.s32.totalorder %s20, 0
      %s23 = sadd.s32 %s22, 1
      %s24 = scalar_select %p21, %s22, %s23
      %p27 = pneg %p21
      %p28 = scmp.eq.s32.totalorder %s12, 1
      %p29 = por %p27, %p28
      %p30 = scmp.ne.s32.totalorder %s22, %s25
      %p31 = scmp.eq.s32.totalorder %s12, 0
      %p32 = por %p30, %p31
      %p33 = scmp.ne.s32.totalorder %s22, %s25
      %p34 = scmp.eq.s32.totalorder %s17, 1
      %p35 = por %p33, %p34
      %p36 = scmp.ne.s32.totalorder %s25, %s26
      %p37 = scmp.eq.s32.totalorder %s17, 0
      %p38 = por %p36, %p37
      %p39 = scmp.ne.s32.totalorder %s25, %s26
      %p40 = scmp.eq.s32.totalorder %s18, 1
      %p41 = por %p39, %p40
      %p43 = scmp.ne.s32.totalorder %s26, %s42
      %p44 = scmp.eq.s32.totalorder %s18, 0
      %p45 = por %p43, %p44
      %s47 = sadd.s32 %s46, 1
      %p50 = scmp.eq.s32.totalorder %s12, 1
      %p51 = scmp.ne.s32.totalorder %s46, %s48
      %p52 = scmp.eq.s32.totalorder %s12, 0
      %p53 = por %p51, %p52
      %p54 = scmp.ne.s32.totalorder %s46, %s48
      %p55 = scmp.eq.s32.totalorder %s17, 1
      %p56 = por %p54, %p55
      %p57 = scmp.ne.s32.totalorder %s48, %s49
      %p58 = scmp.eq.s32.totalorder %s17, 0
      %p59 = por %p57, %p58
      %p60 = scmp.ne.s32.totalorder %s48, %s49
      %p61 = scmp.eq.s32.totalorder %s18, 1
      %p62 = por %p60, %p61
      %p64 = scmp.ne.s32.totalorder %s49, %s63
      %p65 = scmp.eq.s32.totalorder %s18, 0
      %p66 = por %p64, %p65
      %s68 = sadd.s32 %s67, 1
      %p71 = scmp.eq.s32.totalorder %s12, 1
      %p72 = scmp.ne.s32.totalorder %s67, %s69
      %p73 = scmp.eq.s32.totalorder %s12, 0
      %p74 = por %p72, %p73
      %p75 = scmp.ne.s32.totalorder %s67, %s69
      %p76 = scmp.eq.s32.totalorder %s17, 1
      %p77 = por %p75, %p76
      %p78 = scmp.ne.s32.totalorder %s69, %s70
      %p79 = scmp.eq.s32.totalorder %s17, 0
      %p80 = por %p78, %p79
      %p81 = scmp.ne.s32.totalorder %s69, %s70
      %p82 = scmp.eq.s32.totalorder %s18, 1
      %p83 = por %p81, %p82
      %p85 = scmp.ne.s32.totalorder %s70, %s84
      %p86 = scmp.eq.s32.totalorder %s18, 0
      %p87 = por %p85, %p86
      %s88 = ssub.s32 %s12, %s19
      %p89 = scmp.eq.s32.totalorder %s88, 0
      %s91 = sadd.s32 %s90, 1
      %s92 = scalar_select %p89, %s90, %s91
      %p95 = pneg %p89
      %p96 = scmp.eq.s32.totalorder %s12, 1
      %p97 = por %p95, %p96
      %p98 = scmp.ne.s32.totalorder %s90, %s93
      %p99 = scmp.eq.s32.totalorder %s12, 0
      %p100 = por %p98, %p99
      %p101 = scmp.ne.s32.totalorder %s90, %s93
      %p102 = scmp.eq.s32.totalorder %s17, 1
      %p103 = por %p101, %p102
      %p104 = scmp.ne.s32.totalorder %s93, %s94
      %p105 = scmp.eq.s32.totalorder %s17, 0
      %p106 = por %p104, %p105
      %p107 = scmp.ne.s32.totalorder %s93, %s94
      %p108 = scmp.eq.s32.totalorder %s18, 1
      %p109 = por %p107, %p108
      %p111 = scmp.ne.s32.totalorder %s94, %s110
      %p112 = scmp.eq.s32.totalorder %s18, 0
      %p113 = por %p111, %p112
      %p114 = scmp.le.s32.totalorder 1, %s12
      %p115 = scmp.lt.s32.totalorder %s12, 3
      %p116 = pnand %p114, %p115
      %p117 = pneg %p116
      // Predicated region
      $region9: #{tpu_custom_call.1} parent=5 // pred_check
        _
      $region10: #{tpu_custom_call.1} parent=5 // pred_check_branch
        %119 = sbr.rel (%p116) target = $region12
      $region11: #{tpu_custom_call.1} parent=5 // pred_region
        %s120 = ssub.s32 %s12, 1
        // Predicated region
        $region13: #{tpu_custom_call.1} parent=11 // pred_check
          %p121 = pneg %p59
        $region14: #{tpu_custom_call.1} parent=11 // pred_check_branch
          %123 = sbr.rel (%p121) target = $region16
        $region15: #{tpu_custom_call.1} parent=11 // pred_region
          _
        $region16: #{tpu_custom_call.1} parent=11 // pred_fallthru
          _
        // Predicated region
        $region17: #{tpu_custom_call.1} parent=11 // pred_check
          %p124 = pneg %p80
        $region18: #{tpu_custom_call.1} parent=11 // pred_check_branch
          %126 = sbr.rel (%p124) target = $region20
        $region19: #{tpu_custom_call.1} parent=11 // pred_region
          _
        $region20: #{tpu_custom_call.1} parent=11 // pred_fallthru
          _
      $region12: #{tpu_custom_call.1} parent=5 // pred_fallthru
        _
      %p127 = scmp.lt.s32.totalorder %s12, 2
      // Predicated region
      $region21: #{tpu_custom_call.1} parent=5 // pred_check
        %p128 = pneg %p127
      $region22: #{tpu_custom_call.1} parent=5 // pred_check_branch
        %130 = sbr.rel (%p128) target = $region24
      $region23: #{tpu_custom_call.1} parent=5 // pred_region
        // Predicated region
        $region25: #{tpu_custom_call.1} parent=23 // pred_check
          %p131 = pneg %p32
        $region26: #{tpu_custom_call.1} parent=23 // pred_check_branch
          %133 = sbr.rel (%p131) target = $region28
        $region27: #{tpu_custom_call.1} parent=23 // pred_region
          %s134 = smul.u32 2, %s12
          %p135 = scmp.lt.s32.totalorder %s134, 3
          %s136 = scalar_select %p135, %s134, 3
          %s137 = smul.addr %s136, 4
          %s138 = scalar_lea.vmem %s0, %s137
          %s139 = smul.u32 2, %s12
        $region28: #{tpu_custom_call.1} parent=23 // pred_fallthru
          _
      $region24: #{tpu_custom_call.1} parent=5 // pred_fallthru
        _
      %p140 = scmp.le.s32.totalorder 1, %s12
      %p141 = scmp.lt.s32.totalorder %s12, 3
      %p142 = pnand %p140, %p141
      %p143 = pneg %p142
      // Predicated region
      $region29: #{tpu_custom_call.1} parent=5 // pred_check
        _
      $region30: #{tpu_custom_call.1} parent=5 // pred_check_branch
        %145 = sbr.rel (%p142) target = $region32
      $region31: #{tpu_custom_call.1} parent=5 // pred_region
        %s146 = ssub.s32 %s12, 1
        %s147 = smul.u32 2, %s17
        %p148 = scmp.lt.s32.totalorder %s147, 3
        %s149 = scalar_select %p148, %s147, 3
        %s150 = smul.addr %s149, 4
        %s151 = scalar_lea.vmem %s0, %s150
        %p152 = pneg %p38
        %p153 = pneg %p35
        %p154 = pneg %p59
        %p155 = pneg %p56
        %p156 = pneg %p80
        %p157 = pneg %p77
        %p158 = pneg %p106
        %p159 = pneg %p103
        %s160 = sand.u32 %s93, 1
        %s161 = scalar_lea.sflag [#allocation3], %s160
        %s162 = sand.u32 %s93, 1
        %s163 = smul.addr %s162, 64
        %s164 = scalar_lea.vmem [#allocation2], %s163
        %s165 = smul.u32 2, %s17
        %p166 = scmp.lt.s32.totalorder %s165, 3
        %s167 = scalar_select %p166, %s165, 3
        %s168 = smul.addr %s167, 4
        %s169 = scalar_lea.vmem %s0, %s168
        %s170 = smul.u32 2, %s17
        %s171 = smul.u32 2, %s17
        %v172 = vld [vmem:[%s1] sm:$0xff]
        %v173 = vld [vmem:[%s1 + $0x8] sm:$0xff]
        %v174 = vld [vmem:[%s1 + $0x10] sm:$0xff]
        %v175 = vld [vmem:[%s1 + $0x18] sm:$0xff]
        %v176 = vld [vmem:[%s169] sm:$0x77]
        %v177 = vld [vmem:[%s2] sm:$0xff]
        %v178 = vld [vmem:[%s2 + $0x8] sm:$0xff]
        %v179 = vld [vmem:[%s2 + $0x10] sm:$0xff]
        %v180 = vld [vmem:[%s2 + $0x18] sm:$0xff]
        %182 = vset.pattern.permute.xlu0 0
        %183 = vperm.xlu0 %182, %v177
        %v184 = vpop.permute.xlu0 %183
        %187 = vset.pattern.permute.xlu0 0
        %188 = vperm.xlu0 %187, %v178
        %v189 = vpop.permute.xlu0 %188
        %192 = vset.pattern.permute.xlu0 0
        %193 = vperm.xlu0 %192, %v179
        %v194 = vpop.permute.xlu0 %193
        %197 = vset.pattern.permute.xlu0 0
        %198 = vperm.xlu0 %197, %v180
        %v199 = vpop.permute.xlu0 %198
        %202 = vst [vmem:[#allocation1] ss:$2 sm:$0xff] %v176
        %v203 = vld.sshfl [vmem:[#allocation1] sm:$0xff pattern:$0x75316420]
        %v204 = vld.sshfl [vmem:[#allocation1 + $0x8] sm:$0xff pattern:$0x75316420]
        %vm205 = vcmask 23552
        %v207 = vsel %vm205, %v172, 0
        %v210 = vsel %vm205, %v173, 0
        %v213 = vsel %vm205, %v174, 0
        %v216 = vsel %vm205, %v175, 0
        %vm218 = vcmask 1042432
        %v219 = vsel %vm218, %v203, 0
        %v221 = vsel %vm218, %v204, 0
        %223 = vmatpush.msra.mxu0 0.0
        %224 = vmatpush.msra.mxu0 0.0
        %225 = vmatpush.msra.mxu0 0.0
        %226 = vmatpush.msra.mxu0 0.0
        %227 = vmatpush.msra.mxu0 0.0
        %228 = vmatpush.msra.mxu0 0.0
        %229 = vmatpush.msra.mxu0 0.0
        %230 = vmatpush.msra.mxu0 0.0
        %231 = vmatpush.msra.mxu0 0.0
        %232 = vmatpush.msra.mxu0 0.0
        %233 = vmatpush.msra.mxu0 0.0
        %234 = vmatpush.msra.mxu0 0.0
        %235 = vmatpush.msra.mxu0 0.0
        %236 = vmatpush.msra.mxu0 0.0
        %237 = vmatpush.msra.mxu0 0.0
        %238 = vmatpush.msra.mxu0 %v219
        %239 = vmatmul.f32.gmra.mxu0 %v207
        %v240 = vpop.f32.mrf.mxu0
        %v241 = vadd.f32 %v184, %v240
        %242 = vmatmul.f32.gmra.mxu0 %v210
        %v243 = vpop.f32.mrf.mxu0
        %v244 = vadd.f32 %v189, %v243
        %245 = vmatmul.f32.gmra.mxu0 %v213
        %v246 = vpop.f32.mrf.mxu0
        %v247 = vadd.f32 %v194, %v246
        %248 = vmatmul.f32.gmra.mxu0 %v216
        %v249 = vpop.f32.mrf.mxu0
        %v250 = vadd.f32 %v199, %v249
        %251 = vdwg.mxu0
        %252 = vmatpush.msra.mxu0 0.0
        %253 = vmatpush.msra.mxu0 0.0
        %254 = vmatpush.msra.mxu0 0.0
        %255 = vmatpush.msra.mxu0 0.0
        %256 = vmatpush.msra.mxu0 0.0
        %257 = vmatpush.msra.mxu0 0.0
        %258 = vmatpush.msra.mxu0 0.0
        %259 = vmatpush.msra.mxu0 0.0
        %260 = vmatpush.msra.mxu0 0.0
        %261 = vmatpush.msra.mxu0 0.0
        %262 = vmatpush.msra.mxu0 0.0
        %263 = vmatpush.msra.mxu0 0.0
        %264 = vmatpush.msra.mxu0 0.0
        %265 = vmatpush.msra.mxu0 0.0
        %266 = vmatpush.msra.mxu0 0.0
        %267 = vmatpush.msra.mxu0 %v221
        %268 = vmatmul.f32.gmra.mxu0 %v207
        %v269 = vpop.f32.mrf.mxu0
        %v270 = vadd.f32 %v184, %v269
        %271 = vmatmul.f32.gmra.mxu0 %v210
        %v272 = vpop.f32.mrf.mxu0
        %v273 = vadd.f32 %v189, %v272
        %274 = vmatmul.f32.gmra.mxu0 %v213
        %v275 = vpop.f32.mrf.mxu0
        %v276 = vadd.f32 %v194, %v275
        %277 = vmatmul.f32.gmra.mxu0 %v216
        %v278 = vpop.f32.mrf.mxu0
        %v279 = vadd.f32 %v199, %v278
        %280 = vdwg.mxu0
        %v281 = vmax.f32 %v241, 0.0
        %v282 = vmax.f32 %v270, 0.0
        %v283 = vmax.f32 %v244, 0.0
        %v284 = vmax.f32 %v273, 0.0
        %v285 = vmax.f32 %v247, 0.0
        %v286 = vmax.f32 %v276, 0.0
        %v287 = vmax.f32 %v250, 0.0
        %v288 = vmax.f32 %v279, 0.0
        %289 = vst [vmem:[%s164] sm:$0xff] %v281
        %290 = vst [vmem:[%s164 + $0x8] sm:$0xff] %v282
        %291 = vst [vmem:[%s164 + $0x10] sm:$0xff] %v283
        %292 = vst [vmem:[%s164 + $0x18] sm:$0xff] %v284
        %293 = vst [vmem:[%s164 + $0x20] sm:$0xff] %v285
        %294 = vst [vmem:[%s164 + $0x28] sm:$0xff] %v286
        %295 = vst [vmem:[%s164 + $0x30] sm:$0xff] %v287
        %296 = vst [vmem:[%s164 + $0x38] sm:$0xff] %v288
        %s297 = sand.u32 %s93, 1
        %s298 = scalar_lea.sflag [#allocation3], %s297
        %s299 = sand.u32 %s93, 1
        %s300 = smul.addr %s299, 64
        %s301 = scalar_lea.vmem [#allocation2], %s300
        // Predicated region
        $region33: #{tpu_custom_call.1} parent=31 // pred_check
          %p302 = pneg %p103
        $region34: #{tpu_custom_call.1} parent=31 // pred_check_branch
          %304 = sbr.rel (%p302) target = $region36
        $region35: #{tpu_custom_call.1} parent=31 // pred_region
          %s305 = smul.u32 2, %s17
          %307 = vsyncadd %s298, 0
          %s308 = smul.addr %s305, 8
          %s309 = scalar_lea.hbm %s3, %s308
          %s310 = sshll.u32 %s301, 4
          %s311 = int_to_ptr.vmem [resolvable:$true] %s310
          %s312 = sshll.u32 %s309, 4
          %s313 = int_to_ptr.hbm [resolvable:$true] %s312
          %318 = dma.vmem_to_hbm [thread:$0]  %s311, 1024, %s313, %s298, 256, 512, 16
        $region36: #{tpu_custom_call.1} parent=31 // pred_fallthru
          _
      $region32: #{tpu_custom_call.1} parent=5 // pred_fallthru
        _
      %p319 = scmp.le.s32.totalorder 2, %s12
      // Predicated region
      $region37: #{tpu_custom_call.1} parent=5 // pred_check
        %p320 = pneg %p319
      $region38: #{tpu_custom_call.1} parent=5 // pred_check_branch
        %322 = sbr.rel (%p320) target = $region40
      $region39: #{tpu_custom_call.1} parent=5 // pred_region
        %s323 = ssub.s32 %s12, 2
        // Predicated region
        $region41: #{tpu_custom_call.1} parent=39 // pred_check
          %p324 = pneg %p109
        $region42: #{tpu_custom_call.1} parent=39 // pred_check_branch
          %326 = sbr.rel (%p324) target = $region44
        $region43: #{tpu_custom_call.1} parent=39 // pred_region
          %s327 = sand.u32 %s94, 1
          %s328 = scalar_lea.sflag [#allocation3], %s327
          %s329 = sand.u32 %s94, 1
          %s330 = smul.addr %s329, 64
          %s331 = scalar_lea.vmem [#allocation2], %s330
          %333 = dma.done %s328, 1024
        $region44: #{tpu_custom_call.1} parent=39 // pred_fallthru
          _
      $region40: #{tpu_custom_call.1} parent=5 // pred_fallthru
        _
    $region6: #{tpu_custom_call.1} parent=1 // loop_footer
      %s16 = sadd.s32 1, %s12
    $region7: #{tpu_custom_call.1} parent=1 // loop_footer_branch
      %11 = sbr.rel target = $region3
    $region8: #{tpu_custom_call.1} parent=1 // loop_exit
      _
    %334 = vsyncpa [#allocation3], 1
    %s335 = scalar_lea.sflag [#allocation3], 1
    %336 = vsyncpa %s335, 1

</llo_original>
